<compile_context>
chip_gen: v6e
topology: v6e:2x2x1
jax: 0.10.0
libtpu: 0.0.40
codegen_flags: <defaults>
</compile_context>

<pallas_src>
import functools
import math

import jax
import jax.numpy as jnp
from jax.experimental import pallas as pl
from jax.experimental.pallas import tpu as pltpu


# --------------------------------------------------------------------------
# Tile-size selection
# --------------------------------------------------------------------------
_LANE_TILE_CAP = 512        # lane (last-dim) tile cap, multiple of 128
_REDUCE_TILE_CAP = 256      # reduction (sublane) tile cap, multiple of 8
_TILE_BYTES = 2 * 1024 * 1024  # ~2 MiB input block: safe for v7x's 32 MiB
                               # scoped VMEM with double buffering, still big
                               # enough to sit near the HBM roofline.


def _pick_tile(dim_size: int, cap: int, multiple: int) -> int:
    """Largest divisor of `dim_size` that is <= cap and a multiple of `multiple`.

    Falls back to the full dimension (always a legal Pallas block) when the
    dim already fits under the cap or no suitable divisor exists.
    """
    if dim_size <= cap:
        return dim_size
    start = cap - cap % multiple
    for d in range(start, 0, -multiple):
        if dim_size % d == 0:
            return d
    return dim_size


# --------------------------------------------------------------------------
# Kernel
#   x block : (tb, tk, tc)  -> partial sum over axis 1 (second-minor axis)
#   o block : (tb, tc)      -> written once, on the last reduction step
#   acc     : f32 VMEM scratch (tb, tc), resident across the reduction axis
# --------------------------------------------------------------------------
def _mean_kernel(x_ref, o_ref, acc_ref, *, inv_n: float):
    k = pl.program_id(2)

    @pl.when(k == 0)
    def _init():
        acc_ref[...] = jnp.zeros_like(acc_ref)

    # f32 accumulation (no bf16 VPU path on v5e; keeps numerics stable).
    x = x_ref[...].astype(jnp.float32)
    acc_ref[...] += jnp.sum(x, axis=1)

    @pl.when(k == pl.num_programs(2) - 1)
    def _finalize():
        o_ref[...] = (acc_ref[...] * inv_n).astype(o_ref.dtype)


def _mean3_pallas(x3: jax.Array, inv_n: float) -> jax.Array:
    """Mean over axis 1 of a 3-D array (outer, N, inner) -> (outer, inner)."""
    outer, n, inner = x3.shape
    itemsize = jnp.dtype(x3.dtype).itemsize

    # Lane tile: keep the last dim a multiple of 128 (unmasked vst) whenever
    # the array allows it; otherwise use the full dim (always legal).
    if inner % 128 == 0:
        tc = _pick_tile(inner, _LANE_TILE_CAP, 128)
    else:
        tc = inner

    # Reduction tile (second-minor axis of the input block): multiple of 8.
    if n % 8 == 0:
        tk = _pick_tile(n, _REDUCE_TILE_CAP, 8)
    else:
        tk = n

    # Outer tile: bounded so the input block stays under ~_TILE_BYTES.  For
    # the (8,128) rule on the OUTPUT block (tb, tc), tb must be a multiple of
    # 8 or equal the full outer dim; _pick_tile guarantees one of the two.
    cap_tb = max(1, _TILE_BYTES // max(1, tk * tc * itemsize))
    tb = _pick_tile(outer, cap_tb, 8)

    grid = (outer // tb, inner // tc, n // tk)  # reduction axis LAST

    kernel = functools.partial(_mean_kernel, inv_n=inv_n)

    flops = outer * n * inner  # one add per input element (approx)
    bytes_accessed = x3.size * itemsize + outer * inner * itemsize

    return pl.pallas_call(
        kernel,
        out_shape=jax.ShapeDtypeStruct((outer, inner), x3.dtype),
        grid_spec=pltpu.PrefetchScalarGridSpec(
            num_scalar_prefetch=0,
            grid=grid,
            in_specs=[pl.BlockSpec((tb, tk, tc), lambda i, j, k: (i, k, j))],
            out_specs=pl.BlockSpec((tb, tc), lambda i, j, k: (i, j)),
            scratch_shapes=[pltpu.VMEM((tb, tc), jnp.float32)],
        ),
        compiler_params=pltpu.CompilerParams(
            dimension_semantics=("parallel", "parallel", "arbitrary"),
        ),
        cost_estimate=pl.CostEstimate(
            flops=flops, transcendentals=0, bytes_accessed=bytes_accessed
        ),
    )(x3)


def pallas_mean(x: jax.Array, dim: int, keep_dim: bool = False) -> jax.Array:
    """Equivalent of torch.Tensor.mean(dim, keep_dim) as a Pallas TPU kernel."""
    ndim = x.ndim
    axis = dim % ndim  # torch-style negative dim handling
    orig_shape = x.shape
    n = orig_shape[axis]

    # Final output shape (torch semantics); applied wrapper-side via reshape
    # so the kernel always produces a clean 2-D lane-dense output.
    if keep_dim:
        final_shape = tuple(1 if a == axis else s for a, s in enumerate(orig_shape))
    else:
        final_shape = tuple(s for a, s in enumerate(orig_shape) if a != axis)

    # Canonicalize: never reduce over the minor (lane) axis inside the kernel.
    # A wrapper-side transpose of the last two axes keeps the in-kernel
    # reduction on the sublane / grid axis (cheap on v5e's weaker XLU).
    if ndim >= 2 and axis == ndim - 1:
        x = jnp.swapaxes(x, -1, -2)
        axis = ndim - 2

    shape = x.shape
    outer = math.prod(shape[:axis]) if axis > 0 else 1
    inner = math.prod(shape[axis + 1:]) if axis < len(shape) - 1 else 1
    x3 = x.reshape(outer, n, inner)

    out2 = _mean3_pallas(x3, inv_n=1.0 / float(n))  # (outer, inner)
    return out2.reshape(final_shape)


if __name__ == "__main__":
    key = jax.random.PRNGKey(0)
    k1, k2, k3, k4, k5 = jax.random.split(key, 5)

    # 1) EncNet usage: Mean(dim=1) over encoding-layer output (B, K, C)
    x1 = jax.random.normal(k1, (2, 8, 32), dtype=jnp.float32)
    out1 = jax.block_until_ready(pallas_mean(x1, dim=1, keep_dim=False))
    ref1 = jnp.mean(x1, axis=1)
    assert out1.shape == ref1.shape, (out1.shape, ref1.shape)
    assert out1.dtype == ref1.dtype, (out1.dtype, ref1.dtype)
    assert jnp.allclose(out1, ref1, atol=1e-5, rtol=1e-5)

    # keep_dim=True path (wrapper-side reshape)
    out1k = jax.block_until_ready(pallas_mean(x1, dim=1, keep_dim=True))
    assert out1k.shape == (2, 1, 32)
    assert jnp.allclose(out1k, jnp.mean(x1, axis=1, keepdims=True), atol=1e-5)

    # 2) Multi-step reduction grid (accumulator init/finalize path)
    x2 = jax.random.normal(k2, (2, 512, 256), dtype=jnp.float32)
    out2 = jax.block_until_ready(pallas_mean(x2, dim=1))
    assert jnp.allclose(out2, jnp.mean(x2, axis=1), atol=1e-4, rtol=1e-4)

    # 3) Lane-dense tiling with a parallel (non-reduction) grid axis > 1
    x3 = jax.random.normal(k3, (4, 64, 1024), dtype=jnp.float32)
    out3 = jax.block_until_ready(pallas_mean(x3, dim=1))
    assert jnp.allclose(out3, jnp.mean(x3, axis=1), atol=1e-4, rtol=1e-4)

    # 4) Reduction over the last (lane) axis -> wrapper-side axis swap
    x4 = jax.random.normal(k4, (2, 16, 128), dtype=jnp.float32)
    out4 = jax.block_until_ready(pallas_mean(x4, dim=-1))
    assert jnp.allclose(out4, jnp.mean(x4, axis=-1), atol=1e-4, rtol=1e-4)

    # 5) bf16 input: f32 accumulate inside the kernel, cast back on store
    x5 = jax.random.normal(k5, (2, 8, 32), dtype=jnp.bfloat16)
    out5 = jax.block_until_ready(pallas_mean(x5, dim=1))
    ref5 = jnp.mean(x5.astype(jnp.float32), axis=1).astype(jnp.bfloat16)
    assert out5.dtype == jnp.bfloat16
    assert jnp.allclose(out5.astype(jnp.float32), ref5.astype(jnp.float32),
                        atol=1e-2, rtol=1e-2)

    print("KERNEL_OK")
</pallas_src>

<mosaic_0001>
module attributes {stable_mosaic.version = 11 : i64} {
  func.func @_mean_kernel(%arg0: i32, %arg1: i32, %arg2: i32, %arg3: memref<2x8x32xf32, #tpu.memory_space<vmem>>, %arg4: memref<2x32xf32, #tpu.memory_space<vmem>>, %arg5: memref<2x32xf32, #tpu.memory_space<vmem>>) attributes {dimension_semantics = [#tpu.dimension_semantics<parallel>, #tpu.dimension_semantics<parallel>, #tpu.dimension_semantics<arbitrary>], iteration_bounds = array<i64: 1, 1, 1>, scalar_prefetch = 0 : i64, scratch_operands = 1 : i64, tpu.core_type = #tpu.core_type<tc>, window_params = [{transform_indices = @transform_0, window_bounds = array<i64: 2, 8, 32>}, {transform_indices = @transform_1, window_bounds = array<i64: 2, 32>}]} {
    %c0_i32 = arith.constant 0 : i32
    %0 = arith.cmpi eq, %arg2, %c0_i32 : i32
    %1 = arith.extui %0 : i1 to i32
    %c0_i32_0 = arith.constant 0 : i32
    %2 = arith.cmpi ne, %1, %c0_i32_0 : i32
    scf.if %2 {
      %cst_9 = arith.constant 0.000000e+00 : f32
      %11 = vector.broadcast %cst_9 : f32 to vector<2x32xf32>
      %c0_10 = arith.constant 0 : index
      %c0_11 = arith.constant 0 : index
      %12 = vector.load %arg5[%c0_10, %c0_11] : memref<2x32xf32, #tpu.memory_space<vmem>>, vector<2x32xf32>
      tpu.vector_store %arg5[%c0_10, %c0_11], %11 {strides = array<i32>} : memref<2x32xf32, #tpu.memory_space<vmem>>, vector<2x32xf32>,
    } else {
    }
    %c0 = arith.constant 0 : index
    %c0_1 = arith.constant 0 : index
    %c0_2 = arith.constant 0 : index
    %3 = vector.load %arg3[%c0, %c0_1, %c0_2] : memref<2x8x32xf32, #tpu.memory_space<vmem>>, vector<2x8x32xf32>
    %c0_3 = arith.constant 0 : index
    %c0_4 = arith.constant 0 : index
    %4 = vector.load %arg5[%c0_3, %c0_4] : memref<2x32xf32, #tpu.memory_space<vmem>>, vector<2x32xf32>
    %cst = arith.constant dense<0.000000e+00> : vector<2x32xf32>
    %5 = vector.multi_reduction <add>, %3, %cst [1] : vector<2x8x32xf32> to vector<2x32xf32>
    %6 = arith.addf %4, %5 : vector<2x32xf32>
    %c0_5 = arith.constant 0 : index
    %c0_6 = arith.constant 0 : index
    %7 = vector.load %arg5[%c0_5, %c0_6] : memref<2x32xf32, #tpu.memory_space<vmem>>, vector<2x32xf32>
    tpu.vector_store %arg5[%c0_5, %c0_6], %6 {strides = array<i32>} : memref<2x32xf32, #tpu.memory_space<vmem>>, vector<2x32xf32>,
    %c0_i32_7 = arith.constant 0 : i32
    %8 = arith.cmpi eq, %arg2, %c0_i32_7 : i32
    %9 = arith.extui %8 : i1 to i32
    %c0_i32_8 = arith.constant 0 : i32
    %10 = arith.cmpi ne, %9, %c0_i32_8 : i32
    scf.if %10 {
      %c0_9 = arith.constant 0 : index
      %c0_10 = arith.constant 0 : index
      %11 = vector.load %arg5[%c0_9, %c0_10] : memref<2x32xf32, #tpu.memory_space<vmem>>, vector<2x32xf32>
      %cst_11 = arith.constant 1.250000e-01 : f32
      %12 = vector.broadcast %cst_11 : f32 to vector<2x32xf32>
      %13 = arith.mulf %11, %12 : vector<2x32xf32>
      %c0_12 = arith.constant 0 : index
      %c0_13 = arith.constant 0 : index
      %14 = vector.load %arg4[%c0_12, %c0_13] : memref<2x32xf32, #tpu.memory_space<vmem>>, vector<2x32xf32>
      tpu.vector_store %arg4[%c0_12, %c0_13], %13 {strides = array<i32>} : memref<2x32xf32, #tpu.memory_space<vmem>>, vector<2x32xf32>,
    } else {
    }
    return
  }
  func.func @transform_0(%arg0: i32, %arg1: i32, %arg2: i32) -> (i32, i32, i32) {
    %c0_i32 = arith.constant 0 : i32
    return %arg0, %arg2, %arg1 : i32, i32, i32
  }
  func.func @transform_1(%arg0: i32, %arg1: i32, %arg2: i32) -> (i32, i32) {
    %c0_i32 = arith.constant 0 : i32
    return %arg0, %arg1 : i32, i32
  }
}

</mosaic_0001>

<llo_original>
// kernel: tpu_custom_call.1
$region0: #{tpu_custom_call.1}
  #allocation0 [shape = 'u32[]', space=smem, size = 0x4, offset = 0x4, fixed_abs, tag = 'smem constant byte address 0x4 - core index']
  #allocation1 [shape = 'u32[144,128]{1,0:T(1,128)}', space=vmem, size = 0x12000, scoped, tag = 'internal scratch']
  #allocation2 [shape = 'f32[2,32]{1,0:T(2,128)}', space=vmem, size = 0x400, scoped, tag = 'scratch operand']
  %s0 = inlined_call_operand.hbm [shape: f32[2,8,32], index: 0, kind: input, shape index: {}]
  %s1 = inlined_call_operand.hbm [shape: f32[2,32], index: 1, kind: output, shape index: {}]
  %s2 = sld [smem:[#allocation0]]
  $region26: #{tpu_custom_call.1} parent=0
    _
  %s4 = ssub.s32 1, %s2
  %s5 = scalar_select 0, %s4, %s2
  $region1: #{tpu_custom_call.1} parent=0
    #allocation3 [shape = 'u8[8192]{0}', space=vmem, size = 0x2000, scoped, tag = 'input window, operand 0, single buffered']
    #allocation4 [shape = 's32[1]{0}', space=sflag, size = 0x4, scoped, tag = 'scoped memory for tpu_custom_call.1']
    #allocation5 [shape = 's32[1]{0}', space=sflag, size = 0x4, scoped, tag = 'scoped memory for tpu_custom_call.1']
    #allocation6 [shape = 'u8[1024]{0}', space=vmem, size = 0x400, scoped, tag = 'output window, operand 0, single buffered']
    %6 = vsyncpa [#allocation4], 0
    %7 = vsyncpa [#allocation5], 0
    // Predicated region
    $region2: #{tpu_custom_call.1} parent=1 // pred_check
      _
    $region3: #{tpu_custom_call.1} parent=1 // pred_check_branch
      %9 = sbr.rel (0) target = $region5
    $region4: #{tpu_custom_call.1} parent=1 // pred_region
      %s11 = ssub.s32 256, 256
      %12 = vsyncadd [#allocation4], %s11
      %s13 = sshll.u32 [#allocation3], 4
      %s14 = int_to_ptr.vmem [resolvable:$true] %s13
      %19 = dma.hbm_to_vmem [thread:$0]  %s0, 256, %s14, [#allocation4], 128, 128, 8
    $region5: #{tpu_custom_call.1} parent=1 // pred_fallthru
      _
    // Predicated region
    $region6: #{tpu_custom_call.1} parent=1 // pred_check
      _
    $region7: #{tpu_custom_call.1} parent=1 // pred_check_branch
      %21 = sbr.rel (0) target = $region9
    $region8: #{tpu_custom_call.1} parent=1 // pred_region
      %22 = dma.done [#allocation4], 256
    $region9: #{tpu_custom_call.1} parent=1 // pred_fallthru
      _
    %p23 = scmp.eq.s32.totalorder 0, 0
    // Predicated region
    $region10: #{tpu_custom_call.1} parent=1 // pred_check
      %p24 = pneg %p23
    $region11: #{tpu_custom_call.1} parent=1 // pred_check_branch
      %26 = sbr.rel (%p24) target = $region13
    $region12: #{tpu_custom_call.1} parent=1 // pred_region
      %vm27 = vcmask 254976
      %28 = vst.msk [vmem:[#allocation2] sm:$0x3] %vm27, 0.0
    $region13: #{tpu_custom_call.1} parent=1 // pred_fallthru
      _
    %v29 = vld [vmem:[#allocation3] sm:$0xff]
    %v30 = vld [vmem:[#allocation3 + $0x8] sm:$0xff]
    %v31 = vld [vmem:[#allocation2] sm:$0x3]
    %vm32 = vcmask 261120
    %v33 = vsel %vm32, %v29, 0.0
    %v34 = vrot.slane %v33, 4
    %v35 = vadd.f32 %v33, %v34
    %v36 = vrot.slane %v35, 2
    %v37 = vadd.f32 %v35, %v36
    %v38 = vrot.slane %v37, 1
    %v39 = vadd.f32 %v37, %v38
    %v40 = vsel %vm32, %v30, 0.0
    %v41 = vrot.slane %v40, 4
    %v42 = vadd.f32 %v40, %v41
    %v43 = vrot.slane %v42, 2
    %v44 = vadd.f32 %v42, %v43
    %v45 = vrot.slane %v44, 1
    %v46 = vadd.f32 %v44, %v45
    %vm49 = vcmask 1041409
    %v50 = vsel %vm49, %v46, %v39
    %v52 = vadd.f32 %v31, %v50
    %vm53 = vcmask 254976
    %54 = vst.msk [vmem:[#allocation2] sm:$0x3] %vm53, %v52
    // Predicated region
    $region14: #{tpu_custom_call.1} parent=1 // pred_check
      %p55 = pneg %p23
    $region15: #{tpu_custom_call.1} parent=1 // pred_check_branch
      %57 = sbr.rel (%p55) target = $region17
    $region16: #{tpu_custom_call.1} parent=1 // pred_region
      %v58 = vld [vmem:[#allocation2] sm:$0x3]
      %v59 = vmul.f32 %v58, 0.125
      %60 = vst.msk [vmem:[#allocation6] sm:$0x3] %vm53, %v59
    $region17: #{tpu_custom_call.1} parent=1 // pred_fallthru
      _
    // Predicated region
    $region18: #{tpu_custom_call.1} parent=1 // pred_check
      _
    $region19: #{tpu_custom_call.1} parent=1 // pred_check_branch
      %62 = sbr.rel (0) target = $region21
    $region20: #{tpu_custom_call.1} parent=1 // pred_region
      %s64 = ssub.s32 32, 32
      %65 = vsyncadd [#allocation5], %s64
      %s67 = sshll.u32 [#allocation6], 4
      %s68 = int_to_ptr.vmem [resolvable:$true] %s67
      %70 = dma.vmem_to_hbm [thread:$0]  %s68, 32, %s1, [#allocation5]
    $region21: #{tpu_custom_call.1} parent=1 // pred_fallthru
      _
    // Predicated region
    $region22: #{tpu_custom_call.1} parent=1 // pred_check
      _
    $region23: #{tpu_custom_call.1} parent=1 // pred_check_branch
      %72 = sbr.rel (0) target = $region25
    $region24: #{tpu_custom_call.1} parent=1 // pred_region
      %73 = dma.done [#allocation5], 32
    $region25: #{tpu_custom_call.1} parent=1 // pred_fallthru
      _
    %74 = vsyncpa [#allocation4], 1
    %75 = vsyncpa [#allocation5], 1

</llo_original>
